<compile_context>
chip_gen: v7x
topology: tpu7x:2x2x1
jax: 0.10.0
libtpu: 0.0.40
codegen_flags: <defaults>
</compile_context>

<pallas_src>
import functools

import jax
import jax.numpy as jnp
from jax.experimental import pallas as pl
from jax.experimental.pallas import tpu as pltpu


def _wlp_kernel_inplace(w_ref, x_ref, o_ref):
    """float32-output path: accumulate directly in the resident output block."""
    l = pl.program_id(2)  # layer axis (innermost, 'arbitrary' reduction)

    @pl.when(l == 0)
    def _():
        o_ref[...] = jnp.zeros_like(o_ref)

    # x_ref is a (TM, TH) block (leading layer dim squeezed away);
    # w_ref[l] is a pre-normalized scalar read from SMEM.
    o_ref[...] += w_ref[l] * x_ref[...].astype(jnp.float32)


def _wlp_kernel_acc(w_ref, x_ref, o_ref, acc_ref):
    """Generic path (e.g. bf16 output): f32 scratch accumulator, single cast."""
    l = pl.program_id(2)

    @pl.when(l == 0)
    def _():
        acc_ref[...] = jnp.zeros_like(acc_ref)

    acc_ref[...] += w_ref[l] * x_ref[...].astype(jnp.float32)

    @pl.when(l == pl.num_programs(2) - 1)
    def _():
        # Weights were pre-normalized in the wrapper -> epilogue is just a cast.
        o_ref[...] = acc_ref[...].astype(o_ref.dtype)


def _round_down8(v):
    return max(8, (v // 8) * 8)


def _choose_tiles(N, H, in_itemsize, out_itemsize, f32_out, vmem_cap):
    """Pick (TM, TH) token/hidden tile sizes and report the VMEM footprint."""
    # ~4 MiB of input bytes per grid step keeps the ~0.35 us step overhead
    # under ~10% of the HBM DMA time (scaled down if VMEM is small, e.g. v7x).
    x_block_target = min(4 << 20, vmem_cap // 16)

    # Hidden-dim tile: full H unless very large (bounds VMEM independently of TM).
    TH = H if H <= 2048 else 2048

    rows = max(1, x_block_target // (TH * in_itemsize))
    if N <= rows:
        TM = N  # full token extent: always a legal block dim
    else:
        TM = _round_down8(rows)  # last-two block dims must be (8,128)-friendly

    # v7x has 2 TensorCores: if there is only one token tile, split H so the
    # second core still gets work (TH must stay a multiple of 128).
    if pl.cdiv(N, TM) == 1 and TH == H and H >= 256:
        half = -(-H // 2)
        TH = max(128, ((half + 127) // 128) * 128)

    def footprint(tm, th):
        x_bytes = 2 * tm * th * in_itemsize      # double-buffered input block
        o_bytes = 2 * tm * th * out_itemsize     # double-buffered output block
        a_bytes = 0 if f32_out else tm * th * 4  # f32 scratch accumulator
        return x_bytes + o_bytes + a_bytes

    # Safety: shrink TM if (unexpectedly) the pipeline footprint exceeds ~75%
    # of physical VMEM (relevant mostly for the 64 MiB-per-TC v7x).
    budget = (vmem_cap * 3) // 4
    while footprint(TM, TH) > budget and TM > 8:
        TM = _round_down8(TM // 2)

    return TM, TH, footprint(TM, TH)


@functools.partial(jax.jit, static_argnames=("layer_start",))
def weighted_layer_pooling(all_layers, layer_weights, layer_start=4):
    """all_layers: (num_hidden_layers+1, B, S, H); layer_weights: (L+1-layer_start,)."""
    L_total, B, S, H = all_layers.shape
    L_used = L_total - layer_start
    assert L_used >= 1, "layer_start must leave at least one layer"
    N = B * S

    # Contiguous dim-merge reshape: free, no HBM copy. The unused leading layers
    # are never read: the BlockSpec index_map adds the static `layer_start`.
    x = all_layers.reshape(L_total, N, H)

    # Pre-normalize the weights once (XLA-side): kernel is a pure multiply-add.
    w = layer_weights.astype(jnp.float32)
    w = w / jnp.sum(w)

    out_dtype = all_layers.dtype
    f32_out = out_dtype == jnp.float32
    in_itemsize = jnp.dtype(all_layers.dtype).itemsize
    out_itemsize = jnp.dtype(out_dtype).itemsize

    # Generation-aware VMEM capacity (v5e/v6e: 128 MiB, v7x: 64 MiB per TC).
    try:
        vmem_cap = int(pltpu.get_tpu_info().vmem_capacity_bytes)
    except Exception:
        vmem_cap = 64 << 20  # conservative fallback (v7x per-TC)

    TM, TH, fp_bytes = _choose_tiles(N, H, in_itemsize, out_itemsize, f32_out, vmem_cap)
    num_token_tiles = pl.cdiv(N, TM)
    num_h_tiles = pl.cdiv(H, TH)

    # Explicit scoped-VMEM limit: generous headroom over our own footprint,
    # comfortably below physical capacity.
    vmem_limit = int(min(vmem_cap * 17 // 20, max(fp_bytes * 2, 32 << 20)))

    # index_maps receive the scalar-prefetch ref as a trailing positional arg.
    in_specs = [
        pl.BlockSpec(
            (pl.Squeezed(), TM, TH),
            lambda t, h, l, w_ref: (l + layer_start, t, h),
        ),
    ]
    out_specs = pl.BlockSpec((TM, TH), lambda t, h, l, w_ref: (t, h))

    if f32_out:
        kernel = _wlp_kernel_inplace
        scratch_shapes = []
    else:
        kernel = _wlp_kernel_acc
        scratch_shapes = [pltpu.VMEM((TM, TH), jnp.float32)]

    cost = pl.CostEstimate(
        flops=2 * L_used * N * H,
        transcendentals=0,
        bytes_accessed=L_used * N * H * in_itemsize + N * H * out_itemsize,
    )

    out = pl.pallas_call(
        kernel,
        out_shape=jax.ShapeDtypeStruct((N, H), out_dtype),
        grid_spec=pltpu.PrefetchScalarGridSpec(
            num_scalar_prefetch=1,
            grid=(num_token_tiles, num_h_tiles, L_used),  # reduction innermost
            in_specs=in_specs,
            out_specs=out_specs,
            scratch_shapes=scratch_shapes,
        ),
        compiler_params=pltpu.CompilerParams(
            dimension_semantics=("parallel", "parallel", "arbitrary"),
            vmem_limit_bytes=vmem_limit,
        ),
        cost_estimate=cost,
    )(w, x)

    return out.reshape(B, S, H)


def reference(all_layers, layer_weights, layer_start=4):
    x = all_layers[layer_start:].astype(jnp.float32)
    wf = layer_weights.astype(jnp.float32)[:, None, None, None]
    return (wf * x).sum(axis=0) / layer_weights.astype(jnp.float32).sum()


if __name__ == "__main__":
    # Module config (matches nn.Parameter(torch.tensor([1]*(L+1-layer_start))))
    num_hidden_layers = 8
    layer_start = 4
    layer_weights = jnp.ones((num_hidden_layers + 1 - layer_start,), jnp.float32)

    # Small deterministic example: 9 hidden-state tensors of shape (B, S, H)
    B, S, H = 2, 8, 128
    key = jax.random.PRNGKey(0)
    keys = jax.random.split(key, num_hidden_layers + 1)
    ft_all_layers = [jax.random.normal(k, (B, S, H), dtype=jnp.float32) for k in keys]
    all_layers = jnp.stack(ft_all_layers)  # == torch.stack(ft_all_layers)

    # float32 path (accumulates directly into the resident output block)
    out = weighted_layer_pooling(all_layers, layer_weights, layer_start=layer_start)
    out = jax.block_until_ready(out)
    ref = reference(all_layers, layer_weights, layer_start=layer_start)
    assert out.shape == (B, S, H)
    assert jnp.allclose(out, ref, atol=1e-5, rtol=1e-5), "f32 mismatch vs reference"

    # bfloat16 path (f32 scratch accumulator, single cast at the end)
    all_bf16 = all_layers.astype(jnp.bfloat16)
    out_bf = weighted_layer_pooling(all_bf16, layer_weights, layer_start=layer_start)
    out_bf = jax.block_until_ready(out_bf)
    ref_bf = reference(all_bf16, layer_weights, layer_start=layer_start)
    assert out_bf.dtype == jnp.bfloat16
    assert jnp.allclose(
        out_bf.astype(jnp.float32), ref_bf, atol=3e-2, rtol=3e-2
    ), "bf16 mismatch vs reference"

    print("KERNEL_OK")
</pallas_src>

<mosaic_0001>
module attributes {stable_mosaic.version = 11 : i64} {
  func.func @_wlp_kernel_inplace(%arg0: i32, %arg1: i32, %arg2: i32, %arg3: memref<5xf32, #tpu.memory_space<smem>>, %arg4: memref<1x16x128xf32, #tpu.memory_space<vmem>>, %arg5: memref<16x128xf32, #tpu.memory_space<vmem>>) attributes {dimension_semantics = [#tpu.dimension_semantics<parallel>, #tpu.dimension_semantics<parallel>, #tpu.dimension_semantics<arbitrary>], iteration_bounds = array<i64: 1, 1, 5>, scalar_prefetch = 1 : i64, scratch_operands = 0 : i64, tpu.core_type = #tpu.core_type<tc>, window_params = [{transform_indices = @transform_0, window_bounds = array<i64: 1, 16, 128>}, {transform_indices = @transform_1, window_bounds = array<i64: 16, 128>}]} {
    %c0_i32 = arith.constant 0 : i32
    %0 = arith.cmpi eq, %arg2, %c0_i32 : i32
    %1 = arith.extui %0 : i1 to i32
    %c0_i32_0 = arith.constant 0 : i32
    %2 = arith.cmpi ne, %1, %c0_i32_0 : i32
    scf.if %2 {
      %cst = arith.constant 0.000000e+00 : f32
      %12 = vector.broadcast %cst : f32 to vector<16x128xf32>
      %c0_7 = arith.constant 0 : index
      %c0_8 = arith.constant 0 : index
      %13 = vector.load %arg5[%c0_7, %c0_8] : memref<16x128xf32, #tpu.memory_space<vmem>>, vector<16x128xf32>
      tpu.vector_store %arg5[%c0_7, %c0_8], %12 {strides = array<i32>} : memref<16x128xf32, #tpu.memory_space<vmem>>, vector<16x128xf32>,
    } else {
    }
    %c0 = arith.constant 0 : index
    %c0_1 = arith.constant 0 : index
    %3 = vector.load %arg5[%c0, %c0_1] : memref<16x128xf32, #tpu.memory_space<vmem>>, vector<16x128xf32>
    %4 = arith.index_cast %arg2 : i32 to index
    %5 = memref.load %arg3[%4] : memref<5xf32, #tpu.memory_space<smem>>
    %c0_2 = arith.constant 0 : index
    %c0_3 = arith.constant 0 : index
    %c0_4 = arith.constant 0 : index
    %6 = vector.load %arg4[%c0_2, %c0_3, %c0_4] : memref<1x16x128xf32, #tpu.memory_space<vmem>>, vector<1x16x128xf32>
    %7 = vector.shape_cast %6 : vector<1x16x128xf32> to vector<16x128xf32>
    %8 = vector.broadcast %5 : f32 to vector<16x128xf32>
    %9 = arith.mulf %8, %7 : vector<16x128xf32>
    %10 = arith.addf %3, %9 : vector<16x128xf32>
    %c0_5 = arith.constant 0 : index
    %c0_6 = arith.constant 0 : index
    %11 = vector.load %arg5[%c0_5, %c0_6] : memref<16x128xf32, #tpu.memory_space<vmem>>, vector<16x128xf32>
    tpu.vector_store %arg5[%c0_5, %c0_6], %10 {strides = array<i32>} : memref<16x128xf32, #tpu.memory_space<vmem>>, vector<16x128xf32>,
    return
  }
  func.func @transform_0(%arg0: i32, %arg1: i32, %arg2: i32, %arg3: memref<5xf32, #tpu.memory_space<smem>>) -> (i32, i32, i32) {
    %c4_i32 = arith.constant 4 : i32
    %0 = arith.addi %arg2, %c4_i32 : i32
    %c0_i32 = arith.constant 0 : i32
    return %0, %arg0, %arg1 : i32, i32, i32
  }
  func.func @transform_1(%arg0: i32, %arg1: i32, %arg2: i32, %arg3: memref<5xf32, #tpu.memory_space<smem>>) -> (i32, i32) {
    %c0_i32 = arith.constant 0 : i32
    return %arg0, %arg1 : i32, i32
  }
}

</mosaic_0001>

<llo_original>
// kernel: weighted_layer_pooling.1
$region0: #{weighted_layer_pooling.1}
  #allocation0 [shape = 'u32[]', space=smem, size = 0x4, offset = 0x4, fixed_abs, tag = 'smem constant byte address 0x4 - core index']
  #allocation1 [shape = 'u32[144,128]{1,0:T(1,128)}', space=vmem, size = 0x12000, scoped, tag = 'internal scratch']
  #allocation2 [shape = 's32[1]{0}', space=sflag, size = 0x4, scoped, tag = 'scoped memory for weighted_layer_pooling.1']
  #allocation3 [shape = 'u8[512]{0}', space=smem, size = 0x200, scoped, tag = 'prefetched SMEM operand 0']
  %s0 = inlined_call_operand.vmem [shape: f32[5], index: 0, kind: input, shape index: {}]
  %s1 = inlined_call_operand.hbm [shape: f32[9,16,128], index: 1, kind: input, shape index: {}]
  %s2 = inlined_call_operand.hbm [shape: f32[16,128], index: 2, kind: output, shape index: {}]
  %s3 = sld [smem:[#allocation0]]
  $region45: #{weighted_layer_pooling.1} parent=0
    _
  %s5 = ssub.s32 1, %s3
  %s6 = scalar_select 0, %s5, %s3
  %s7 = sshll.u32 %s0, 4
  %s8 = int_to_ptr.vmem [resolvable:$true] %s7
  %10 = dma.vmem_to_smem %s8, 16, [#allocation3], [#allocation2]
  %11 = dma.done [#allocation2], 16
  %12 = sfence
  $region1: #{weighted_layer_pooling.1} parent=0
    #allocation4 [shape = 'u8[16384]{0}', space=vmem, size = 0x4000, scoped, tag = 'input window, operand 1']
    #allocation5 [shape = 's32[2]{0}', space=sflag, size = 0x8, scoped, tag = 'scoped memory for weighted_layer_pooling.1']
    #allocation6 [shape = 's32[2]{0}', space=sflag, size = 0x8, scoped, tag = 'scoped memory for weighted_layer_pooling.1']
    #allocation7 [shape = 'u8[8192]{0}', space=vmem, size = 0x2000, scoped, tag = 'output window, operand 0, single buffered']
    %13 = vsyncpa [#allocation5], 0
    %s14 = scalar_lea.sflag [#allocation5], 1
    %15 = vsyncpa %s14, 0
    %16 = vsyncpa [#allocation6], 0
    loop: start=0, step=1, limit=7
    $region2: #{weighted_layer_pooling.1} parent=1 // loop_pre_header
      _
    $region3: #{weighted_layer_pooling.1} parent=1 // loop_header
      %s18 = sphi 0, %s22
      %p19 = scmp.ge.s32.totalorder %s18, 7
      %s25 = sphi 0, %s44
      %s26 = sphi 0, %s40
      %s27 = sphi 0, %s36
      %s28 = sphi 0, %s25
      %s29 = sphi 0, %s26
      %s30 = sphi 0, %s27
      %s31 = sphi 0, %s28
      %s32 = sphi 0, %s29
      %s33 = sphi 0, %s30
      %s53 = sphi 0, %s55
      %s56 = sphi 0, %s53
      %s57 = sphi 0, %s56
      %s73 = sphi 0, %s57
      %s81 = sphi 0, %s83
      %s84 = sphi 0, %s81
      %s85 = sphi 0, %s84
      %s101 = sphi 0, %s85
    $region4: #{weighted_layer_pooling.1} parent=1 // loop_header_branch
      %21 = sbr.rel (%p19) target = $region8
    $region5: #{weighted_layer_pooling.1} parent=1 // loop_body
      %s23 = ssub.s32 %s18, 1
      %s24 = ssub.s32 %s18, 2
      %s34 = sadd.s32 1, %s27
      %p35 = scmp.ge.s32.totalorder %s34, 5
      %s36 = scalar_select %p35, 0, %s34
      %s37 = sadd.s32 1, %s26
      %s38 = scalar_select %p35, %s37, %s26
      %p39 = scmp.ge.s32.totalorder %s38, 1
      %s40 = scalar_select %p39, 0, %s38
      %s41 = sadd.s32 1, %s25
      %s42 = scalar_select %p39, %s41, %s25
      %p43 = scmp.ge.s32.totalorder %s42, 1
      %s44 = scalar_select %p43, 0, %s42
      %s45 = sadd.s32 %s27, 4
      %s46 = sadd.s32 %s36, 4
      %s47 = ssub.s32 %s45, %s46
      %s48 = ssub.s32 %s25, %s44
      %s49 = sor.u32 %s47, %s48
      %s50 = ssub.s32 %s26, %s40
      %s51 = sor.u32 %s49, %s50
      %p52 = scmp.eq.s32.totalorder %s51, 0
      %s54 = sadd.s32 %s53, 1
      %s55 = scalar_select %p52, %s53, %s54
      %p58 = pneg %p52
      %p59 = scmp.eq.s32.totalorder %s18, 4
      %p60 = por %p58, %p59
      %p61 = scmp.ne.s32.totalorder %s53, %s56
      %p62 = scmp.eq.s32.totalorder %s18, 0
      %p63 = por %p61, %p62
      %p64 = scmp.ne.s32.totalorder %s53, %s56
      %p65 = scmp.eq.s32.totalorder %s23, 4
      %p66 = por %p64, %p65
      %p67 = scmp.ne.s32.totalorder %s56, %s57
      %p68 = scmp.eq.s32.totalorder %s23, 0
      %p69 = por %p67, %p68
      %p70 = scmp.ne.s32.totalorder %s56, %s57
      %p71 = scmp.eq.s32.totalorder %s24, 4
      %p72 = por %p70, %p71
      %p74 = scmp.ne.s32.totalorder %s57, %s73
      %p75 = scmp.eq.s32.totalorder %s24, 0
      %p76 = por %p74, %p75
      %s77 = ssub.s32 %s25, %s44
      %s78 = ssub.s32 %s26, %s40
      %s79 = sor.u32 %s77, %s78
      %p80 = scmp.eq.s32.totalorder %s79, 0
      %s82 = sadd.s32 %s81, 1
      %s83 = scalar_select %p80, %s81, %s82
      %p86 = pneg %p80
      %p87 = scmp.eq.s32.totalorder %s18, 4
      %p88 = por %p86, %p87
      %p89 = scmp.ne.s32.totalorder %s81, %s84
      %p90 = scmp.eq.s32.totalorder %s18, 0
      %p91 = por %p89, %p90
      %p92 = scmp.ne.s32.totalorder %s81, %s84
      %p93 = scmp.eq.s32.totalorder %s23, 4
      %p94 = por %p92, %p93
      %p95 = scmp.ne.s32.totalorder %s84, %s85
      %p96 = scmp.eq.s32.totalorder %s23, 0
      %p97 = por %p95, %p96
      %p98 = scmp.ne.s32.totalorder %s84, %s85
      %p99 = scmp.eq.s32.totalorder %s24, 4
      %p100 = por %p98, %p99
      %p102 = scmp.ne.s32.totalorder %s85, %s101
      %p103 = scmp.eq.s32.totalorder %s24, 0
      %p104 = por %p102, %p103
      %p105 = scmp.le.s32.totalorder 1, %s18
      %p106 = scmp.lt.s32.totalorder %s18, 6
      %p107 = pnand %p105, %p106
      %p108 = pneg %p107
      // Predicated region
      $region9: #{weighted_layer_pooling.1} parent=5 // pred_check
        _
      $region10: #{weighted_layer_pooling.1} parent=5 // pred_check_branch
        %110 = sbr.rel (%p107) target = $region12
      $region11: #{weighted_layer_pooling.1} parent=5 // pred_region
        %s111 = ssub.s32 %s18, 1
      $region12: #{weighted_layer_pooling.1} parent=5 // pred_fallthru
        _
      %p112 = scmp.lt.s32.totalorder %s18, 5
      // Predicated region
      $region13: #{weighted_layer_pooling.1} parent=5 // pred_check
        %p113 = pneg %p112
      $region14: #{weighted_layer_pooling.1} parent=5 // pred_check_branch
        %115 = sbr.rel (%p113) target = $region16
      $region15: #{weighted_layer_pooling.1} parent=5 // pred_region
        // Predicated region
        $region17: #{weighted_layer_pooling.1} parent=15 // pred_check
          %p116 = pneg %p63
        $region18: #{weighted_layer_pooling.1} parent=15 // pred_check_branch
          %118 = sbr.rel (%p116) target = $region20
        $region19: #{weighted_layer_pooling.1} parent=15 // pred_region
          %s119 = sand.u32 %s53, 1
          %s120 = scalar_lea.sflag [#allocation5], %s119
          %s121 = sand.u32 %s53, 1
          %s122 = smul.addr %s121, 16
          %s123 = scalar_lea.vmem [#allocation4], %s122
          %s124 = sadd.s32 %s27, 4
          %s125 = smul.u32 2, %s25
          %s127 = ssub.s32 256, 256
          %128 = vsyncadd %s120, %s127
          %s129 = sadd.s32 %s26, %s125
          %s130 = smul.addr %s124, 2
          %s131 = sadd.s32 %s129, %s130
          %s132 = smul.addr %s131, 128
          %s133 = scalar_lea.hbm %s1, %s132
          %s134 = sshll.u32 %s123, 4
          %s135 = int_to_ptr.vmem [resolvable:$true] %s134
          %140 = dma.hbm_to_vmem [thread:$0]  %s133, 256, %s135, %s120, 128, 128, 8
        $region20: #{weighted_layer_pooling.1} parent=15 // pred_fallthru
          _
      $region16: #{weighted_layer_pooling.1} parent=5 // pred_fallthru
        _
      %p141 = scmp.le.s32.totalorder 1, %s18
      %p142 = scmp.lt.s32.totalorder %s18, 6
      %p143 = pnand %p141, %p142
      %p144 = pneg %p143
      // Predicated region
      $region21: #{weighted_layer_pooling.1} parent=5 // pred_check
        _
      $region22: #{weighted_layer_pooling.1} parent=5 // pred_check_branch
        %146 = sbr.rel (%p143) target = $region24
      $region23: #{weighted_layer_pooling.1} parent=5 // pred_region
        %s147 = ssub.s32 %s18, 1
        %s148 = sand.u32 %s56, 1
        %s149 = scalar_lea.sflag [#allocation5], %s148
        %s150 = sand.u32 %s56, 1
        %s151 = smul.addr %s150, 16
        %s152 = scalar_lea.vmem [#allocation4], %s151
        // Predicated region
        $region25: #{weighted_layer_pooling.1} parent=23 // pred_check
          %p153 = pneg %p69
        $region26: #{weighted_layer_pooling.1} parent=23 // pred_check_branch
          %155 = sbr.rel (%p153) target = $region28
        $region27: #{weighted_layer_pooling.1} parent=23 // pred_region
          %156 = dma.done %s149, 256
        $region28: #{weighted_layer_pooling.1} parent=23 // pred_fallthru
          _
        %s157 = sand.u32 %s56, 1
        %s158 = scalar_lea.sflag [#allocation5], %s157
        %s159 = sand.u32 %s56, 1
        %s160 = smul.addr %s159, 16
        %s161 = scalar_lea.vmem [#allocation4], %s160
        %p162 = pneg %p69
        %p163 = pneg %p66
        %p164 = pneg %p97
        %p165 = pneg %p94
        %s166 = sadd.s32 %s30, 4
        %s167 = smul.u32 2, %s28
        %s168 = smul.u32 2, %s28
        %p169 = scmp.eq.s32.totalorder %s30, 0
        // Predicated region
        $region29: #{weighted_layer_pooling.1} parent=23 // pred_check
          %p170 = pneg %p169
        $region30: #{weighted_layer_pooling.1} parent=23 // pred_check_branch
          %172 = sbr.rel (%p170) target = $region32
        $region31: #{weighted_layer_pooling.1} parent=23 // pred_region
          %173 = vst [vmem:[#allocation7] sm:$0xff] 0.0
          %174 = vst [vmem:[#allocation7 + $0x8] sm:$0xff] 0.0
        $region32: #{weighted_layer_pooling.1} parent=23 // pred_fallthru
          _
        %v175 = vld [vmem:[#allocation7] sm:$0xff]
        %v176 = vld [vmem:[#allocation7 + $0x8] sm:$0xff]
        %s177 = sld [smem:[#allocation3 + %s30]]
        %v178 = vld [vmem:[%s152] sm:$0xff]
        %v179 = vld [vmem:[%s152 + $0x8] sm:$0xff]
        %v180 = vstv %s177
        %v181 = vmul.f32 %v180, %v178
        %v182 = vmul.f32 %v180, %v179
        %v183 = vadd.f32 %v175, %v181
        %v184 = vadd.f32 %v176, %v182
        %185 = vst [vmem:[#allocation7] sm:$0xff] %v183
        %186 = vst [vmem:[#allocation7 + $0x8] sm:$0xff] %v184
        // Predicated region
        $region33: #{weighted_layer_pooling.1} parent=23 // pred_check
          %p187 = pneg %p94
        $region34: #{weighted_layer_pooling.1} parent=23 // pred_check_branch
          %189 = sbr.rel (%p187) target = $region36
        $region35: #{weighted_layer_pooling.1} parent=23 // pred_region
          %s190 = smul.u32 2, %s28
          %s192 = ssub.s32 256, 256
          %193 = vsyncadd [#allocation6], %s192
          %s194 = sadd.s32 %s29, %s190
          %s195 = smul.addr %s194, 128
          %s196 = scalar_lea.hbm %s2, %s195
          %s197 = sshll.u32 [#allocation7], 4
          %s198 = int_to_ptr.vmem [resolvable:$true] %s197
          %203 = dma.vmem_to_hbm [thread:$0]  %s198, 256, %s196, [#allocation6], 128, 128, 8
        $region36: #{weighted_layer_pooling.1} parent=23 // pred_fallthru
          _
        // Predicated region
        $region37: #{weighted_layer_pooling.1} parent=23 // pred_check
          %p204 = pneg %p94
        $region38: #{weighted_layer_pooling.1} parent=23 // pred_check_branch
          %206 = sbr.rel (%p204) target = $region40
        $region39: #{weighted_layer_pooling.1} parent=23 // pred_region
          %207 = dma.done [#allocation6], 256
        $region40: #{weighted_layer_pooling.1} parent=23 // pred_fallthru
          _
      $region24: #{weighted_layer_pooling.1} parent=5 // pred_fallthru
        _
      %p208 = scmp.le.s32.totalorder 2, %s18
      // Predicated region
      $region41: #{weighted_layer_pooling.1} parent=5 // pred_check
        %p209 = pneg %p208
      $region42: #{weighted_layer_pooling.1} parent=5 // pred_check_branch
        %211 = sbr.rel (%p209) target = $region44
      $region43: #{weighted_layer_pooling.1} parent=5 // pred_region
        %s212 = ssub.s32 %s18, 2
      $region44: #{weighted_layer_pooling.1} parent=5 // pred_fallthru
        _
    $region6: #{weighted_layer_pooling.1} parent=1 // loop_footer
      %s22 = sadd.s32 1, %s18
    $region7: #{weighted_layer_pooling.1} parent=1 // loop_footer_branch
      %17 = sbr.rel target = $region3
    $region8: #{weighted_layer_pooling.1} parent=1 // loop_exit
      _
    %213 = vsyncpa [#allocation5], 1
    %s214 = scalar_lea.sflag [#allocation5], 1
    %215 = vsyncpa %s214, 1
    %216 = vsyncpa [#allocation6], 1
    %s217 = scalar_lea.sflag [#allocation6], 1
    %218 = vsyncpa %s217, 1

</llo_original>
